<compile_context>
chip_gen: v6e
topology: v6e:2x2x1
jax: 0.10.0
libtpu: 0.0.40
codegen_flags: <defaults>
</compile_context>

<pallas_src>
import math

import jax
import jax.numpy as jnp
from jax.experimental import pallas as pl
from jax.experimental.pallas import tpu as pltpu

LEAKY_SLOPE = 0.2            # blox default LeakyReLU slope
_SPLIT_MIN_B = 256           # below this, a single grid step (no v7x 2-core split needed)
_VMEM_BUDGET = 40 * 1024 * 1024   # keep tiles under this (headroom inside v7x 64 MiB)
_VMEM_LIMIT_CAP = 64 * 1024 * 1024


def _round_up(x, m):
    return (x + m - 1) // m * m


def _cdiv(a, b):
    return (a + b - 1) // b


def _const_spec(shape):
    """Full-array, VMEM-resident operand (constant index map). Single-buffered if supported."""
    ndim = len(shape)
    idx = lambda i, _n=ndim: (0,) * _n
    buffered = getattr(pl, "Buffered", None)
    if buffered is not None:
        try:
            return pl.BlockSpec(shape, idx, pipeline_mode=buffered(1))
        except TypeError:
            pass
    return pl.BlockSpec(shape, idx)


def _make_kernel(input_szs, num_layers, in_pad, mid_pad, h_pad):
    """Fused MLP kernel.

    Ref order: x_0..x_{K-1}, w0, [w_mid_packed], [w_last], b_packed, out_h, out_c, xcat_scratch
      x_k          : (tm, input_szs[k])                 activation tile (any float dtype)
      w0           : (in_pad, mid_pad|2*h_pad)  bf16    zero-padded, concat-fused first layer
      w_mid_packed : (L-2, mid_pad, mid_pad)    bf16    hidden layers (only if L > 2)
      w_last       : (mid_pad, 2*h_pad)         bf16    h/c halves packed to 128-lane regions
      b_packed     : (L, 1, max(mid_pad, 2*h_pad)) f32  zero-padded biases
      out_h/out_c  : (tm, h_pad)                        lane-dense outputs
      xcat_scratch : (tm, in_pad) f32 VMEM              fused-concat staging buffer
    """
    K = len(input_szs)
    L = num_layers
    out_pad = 2 * h_pad
    total_in = sum(input_szs)
    n_w = 1 + (1 if L > 2 else 0) + (1 if L > 1 else 0)

    def kernel(*refs):
        in_refs = refs[:K]
        w_refs = refs[K:K + n_w]
        b_ref = refs[K + n_w]
        oh_ref = refs[K + n_w + 1]
        oc_ref = refs[K + n_w + 2]
        xcat_ref = refs[K + n_w + 3]

        w0_ref = w_refs[0]
        wmid_ref = w_refs[1] if L > 2 else None
        wlast_ref = w_refs[-1] if L > 1 else None
        tm = xcat_ref.shape[0]

        # ---- Layer 0: concat fused into one lane-dense (tm, in_pad) buffer, ONE dot ----
        if in_pad > total_in:
            # zero the padding lanes (padded W0 rows are zero, but VMEM garbage could be NaN)
            xcat_ref[:, total_in:] = jnp.zeros((tm, in_pad - total_in), jnp.float32)
        off = 0
        for k, sz in enumerate(input_szs):
            xcat_ref[:, off:off + sz] = in_refs[k][...].astype(jnp.float32)
            off += sz
        x = xcat_ref[...].astype(jnp.bfloat16)

        h = jnp.dot(x, w0_ref[...], preferred_element_type=jnp.float32)
        d0 = mid_pad if L > 1 else out_pad
        h = h + b_ref[0, :, :d0]                        # (1, d0) f32 broadcast
        if L > 1:
            h = jnp.maximum(h, LEAKY_SLOPE * h)         # LeakyReLU, f32

        # ---- Hidden layers 1 .. L-2 -------------------------------------------------
        for i in range(1, L - 1):
            h = jnp.dot(h.astype(jnp.bfloat16), wmid_ref[i - 1],
                        preferred_element_type=jnp.float32)
            h = h + b_ref[i, :, :mid_pad]
            h = jnp.maximum(h, LEAKY_SLOPE * h)

        # ---- Last layer: h/c halves packed into separate 128-lane-aligned regions ----
        if L > 1:
            h = jnp.dot(h.astype(jnp.bfloat16), wlast_ref[...],
                        preferred_element_type=jnp.float32)
            h = h + b_ref[L - 1, :, :out_pad]

        oh_ref[...] = h[:, :h_pad].astype(oh_ref.dtype)   # lane-dense stores
        oc_ref[...] = h[:, h_pad:].astype(oc_ref.dtype)

    return kernel


def mlp_lstm_init_forward(inputs, input_szs, weight_ops, b_packed, *, num_layers,
                          in_pad, mid_pad, h_pad, tm_max=1024, out_dtype=jnp.float32):
    """Runs the fused initializer MLP.

    inputs: list of (B, input_szs[k]) arrays. Returns (h_padded, c_padded), each (B, h_pad).
    """
    B = inputs[0].shape[0]
    input_szs = tuple(int(s) for s in input_szs)

    # ---- batch tile: no wrapper padding; >=2 steps for mid-size B (v7x 2 TCs) ----
    if B < _SPLIT_MIN_B:
        tm = B                                          # single full block, exact rows
    elif B <= tm_max:
        tm = _round_up((B + 1) // 2, 8)                 # 2-way split across cores
    else:
        tm = tm_max                                     # multiple of 8; last block masked

    out_itemsize = jnp.dtype(out_dtype).itemsize

    def _vmem_est(t):
        params = sum(int(w.size) * w.dtype.itemsize for w in weight_ops)
        params += int(b_packed.size) * b_packed.dtype.itemsize
        io_in = sum(t * x.shape[1] * x.dtype.itemsize for x in inputs)
        io_out = 2 * t * h_pad * out_itemsize
        scratch = t * in_pad * 4
        return 2 * params + 2 * (io_in + io_out) + scratch

    while tm > 64 and _vmem_est(tm) > _VMEM_BUDGET:
        tm = max(64, _round_up(tm // 2, 8))

    grid = (_cdiv(B, tm),)

    in_specs = [pl.BlockSpec((tm, sz), lambda i: (i, 0)) for sz in input_szs]
    for w in weight_ops:                                # VMEM-resident params, single-buffered
        in_specs.append(_const_spec(w.shape))
    in_specs.append(_const_spec(b_packed.shape))

    out_specs = [pl.BlockSpec((tm, h_pad), lambda i: (i, 0)),
                 pl.BlockSpec((tm, h_pad), lambda i: (i, 0))]
    out_shape = (jax.ShapeDtypeStruct((B, h_pad), out_dtype),
                 jax.ShapeDtypeStruct((B, h_pad), out_dtype))

    vmem_limit = int(min(_VMEM_LIMIT_CAP,
                         max(32 * 1024 * 1024, _vmem_est(tm) + 4 * 1024 * 1024)))

    kernel = _make_kernel(input_szs, num_layers, in_pad, mid_pad, h_pad)
    h_out, c_out = pl.pallas_call(
        kernel,
        out_shape=out_shape,
        grid=grid,
        in_specs=in_specs,
        out_specs=out_specs,
        scratch_shapes=[pltpu.VMEM((tm, in_pad), jnp.float32)],
        compiler_params=pltpu.CompilerParams(
            dimension_semantics=("parallel",),
            vmem_limit_bytes=vmem_limit),
    )(*inputs, *weight_ops, b_packed)
    return h_out, c_out


class MLPLSTMCellInitializerPallas:
    """JAX/Pallas port of MLPLSTMCellInitializer (non-spatial / MLP path)."""

    def __init__(self, key, input_szs, hidden_size, num_layers=3, mid_size=128):
        assert num_layers >= 1
        self.hidden_size = int(hidden_size)
        self.num_layers = int(num_layers)
        self.input_szs = tuple(int(s) for s in input_szs)
        H = self.hidden_size
        L = self.num_layers
        out_dim = 2 * H
        total_in = sum(self.input_szs)
        dims = [total_in] + [int(mid_size)] * (L - 1) + [out_dim]

        # PyTorch nn.Linear-style init: U(-1/sqrt(fan_in), 1/sqrt(fan_in)).
        weights, biases = [], []
        for i in range(L):
            fan_in, fan_out = dims[i], dims[i + 1]
            key, kw, kb = jax.random.split(key, 3)
            bound = 1.0 / math.sqrt(fan_in)
            # stored as (in, out): transpose of PyTorch's (out, in) Linear weight
            w = jax.random.uniform(kw, (fan_in, fan_out), jnp.float32, -bound, bound)
            b = jax.random.uniform(kb, (fan_out,), jnp.float32, -bound, bound)
            weights.append(w)
            biases.append(b)

        # bf16 weights (also used by the pure-JAX reference), f32 biases.
        self.weights_bf16 = [w.astype(jnp.bfloat16) for w in weights]
        self.biases = biases

        # ---- Ragged / per-layer padded packing ------------------------------------
        self.total_in = total_in
        self.in_pad = _round_up(total_in, 128)
        self.h_pad = _round_up(H, 128)
        out_pad = 2 * self.h_pad
        self.mid_pad = _round_up(int(mid_size), 128) if L > 1 else 0
        mid_size = int(mid_size)

        def pack_last_cols(dst, rows, src):
            # src: (rows, 2H) -> h half at lanes [0:H], c half at lanes [h_pad:h_pad+H]
            dst = dst.at[:rows, :H].set(src[:, :H])
            dst = dst.at[:rows, self.h_pad:self.h_pad + H].set(src[:, H:])
            return dst

        weight_ops = []
        l0_out = self.mid_pad if L > 1 else out_pad
        w0 = jnp.zeros((self.in_pad, l0_out), jnp.bfloat16)
        if L > 1:
            w0 = w0.at[:total_in, :mid_size].set(self.weights_bf16[0])
        else:
            w0 = pack_last_cols(w0, total_in, self.weights_bf16[0])
        weight_ops.append(w0)

        if L > 2:
            wmid = jnp.zeros((L - 2, self.mid_pad, self.mid_pad), jnp.bfloat16)
            for i in range(1, L - 1):
                wmid = wmid.at[i - 1, :mid_size, :mid_size].set(self.weights_bf16[i])
            weight_ops.append(wmid)

        if L > 1:
            wlast = jnp.zeros((self.mid_pad, out_pad), jnp.bfloat16)
            wlast = pack_last_cols(wlast, mid_size, self.weights_bf16[L - 1])
            weight_ops.append(wlast)
        self.weight_ops = weight_ops

        b_pad = max(out_pad, self.mid_pad)
        b_packed = jnp.zeros((L, 1, b_pad), jnp.float32)
        for i in range(L - 1):
            b_packed = b_packed.at[i, 0, :mid_size].set(biases[i])
        b_packed = b_packed.at[L - 1, 0, :H].set(biases[L - 1][:H])
        b_packed = b_packed.at[L - 1, 0, self.h_pad:self.h_pad + H].set(biases[L - 1][H:])
        self.b_packed = b_packed

    def __call__(self, *inputs, out_dtype=jnp.float32):
        assert len(inputs) == len(self.input_szs)
        h_out, c_out = mlp_lstm_init_forward(
            list(inputs), self.input_szs, self.weight_ops, self.b_packed,
            num_layers=self.num_layers, in_pad=self.in_pad, mid_pad=self.mid_pad,
            h_pad=self.h_pad, out_dtype=out_dtype)
        H = self.hidden_size
        if self.h_pad == H:
            return h_out, c_out
        return h_out[:, :H], c_out[:, :H]


def _reference_forward(module, *inputs):
    """Pure-JAX reference using the same bf16-weight / f32-accumulation math."""
    x = jnp.concatenate([inp.astype(jnp.bfloat16) for inp in inputs], axis=1)
    ws, bs = module.weights_bf16, module.biases
    L = len(ws)
    h = jnp.dot(x, ws[0], preferred_element_type=jnp.float32) + bs[0]
    if L > 1:
        h = jnp.maximum(h, LEAKY_SLOPE * h)
    for i in range(1, L):
        h = jnp.dot(h.astype(jnp.bfloat16), ws[i], preferred_element_type=jnp.float32) + bs[i]
        if i != L - 1:
            h = jnp.maximum(h, LEAKY_SLOPE * h)
    H = module.hidden_size
    return h[:, :H], h[:, H:]


if __name__ == "__main__":
    key = jax.random.PRNGKey(0)
    k_params, k_start, k_goal, k_big = jax.random.split(key, 4)

    # Small shapes: batch=2, each image encoding 64-d, cell state dim H=32,
    # hp.init_mlp_layers=3, hp.init_mlp_mid_sz=128, hp.use_conv_lstm=False.
    B, ENC, H = 2, 64, 32
    enc_start = jax.random.normal(k_start, (B, ENC), jnp.float32)
    enc_goal = jax.random.normal(k_goal, (B, ENC), jnp.float32)

    module = MLPLSTMCellInitializerPallas(
        k_params, input_szs=(ENC, ENC), hidden_size=H, num_layers=3, mid_size=128
    )

    h0, c0 = module(enc_start, enc_goal)
    jax.block_until_ready((h0, c0))
    h0_ref, c0_ref = _reference_forward(module, enc_start, enc_goal)
    assert h0.shape == (B, H) and c0.shape == (B, H)
    assert jnp.allclose(h0, h0_ref, atol=2e-4, rtol=2e-4), "h0 mismatch vs reference (small B)"
    assert jnp.allclose(c0, c0_ref, atol=2e-4, rtol=2e-4), "c0 mismatch vs reference (small B)"

    # Mid-size batch not divisible by the tile: exercises the >=2-step parallel grid and the
    # masked partial last block (no wrapper-side padding / batch re-slicing).
    B2 = 300
    ks1, ks2 = jax.random.split(k_big)
    big_start = jax.random.normal(ks1, (B2, ENC), jnp.float32)
    big_goal = jax.random.normal(ks2, (B2, ENC), jnp.float32)
    h0b, c0b = module(big_start, big_goal)
    jax.block_until_ready((h0b, c0b))
    h0b_ref, c0b_ref = _reference_forward(module, big_start, big_goal)
    assert h0b.shape == (B2, H) and c0b.shape == (B2, H)
    assert jnp.allclose(h0b, h0b_ref, atol=2e-4, rtol=2e-4), "h0 mismatch vs reference (B=300)"
    assert jnp.allclose(c0b, c0b_ref, atol=2e-4, rtol=2e-4), "c0 mismatch vs reference (B=300)"

    print("KERNEL_OK")
</pallas_src>

<mosaic_0001>
module attributes {stable_mosaic.version = 11 : i64} {
  func.func @kernel(%arg0: i32, %arg1: memref<2x64xf32, #tpu.memory_space<vmem>>, %arg2: memref<2x64xf32, #tpu.memory_space<vmem>>, %arg3: memref<128x128xbf16, #tpu.memory_space<vmem>>, %arg4: memref<1x128x128xbf16, #tpu.memory_space<vmem>>, %arg5: memref<128x256xbf16, #tpu.memory_space<vmem>>, %arg6: memref<3x1x256xf32, #tpu.memory_space<vmem>>, %arg7: memref<2x128xf32, #tpu.memory_space<vmem>>, %arg8: memref<2x128xf32, #tpu.memory_space<vmem>>, %arg9: memref<2x128xf32, #tpu.memory_space<vmem>>) attributes {dimension_semantics = [#tpu.dimension_semantics<parallel>], iteration_bounds = array<i64: 1>, scalar_prefetch = 0 : i64, scratch_operands = 1 : i64, tpu.core_type = #tpu.core_type<tc>, window_params = [{transform_indices = @transform_0, window_bounds = array<i64: 2, 64>}, {transform_indices = @transform_1, window_bounds = array<i64: 2, 64>}, {pipeline_mode = #tpu.pipeline_mode<synchronous>, transform_indices = @transform_2, window_bounds = array<i64: 128, 128>}, {pipeline_mode = #tpu.pipeline_mode<synchronous>, transform_indices = @transform_3, window_bounds = array<i64: 1, 128, 128>}, {pipeline_mode = #tpu.pipeline_mode<synchronous>, transform_indices = @transform_4, window_bounds = array<i64: 128, 256>}, {pipeline_mode = #tpu.pipeline_mode<synchronous>, transform_indices = @transform_5, window_bounds = array<i64: 3, 1, 256>}, {transform_indices = @transform_6, window_bounds = array<i64: 2, 128>}, {transform_indices = @transform_7, window_bounds = array<i64: 2, 128>}]} {
    %c0 = arith.constant 0 : index
    %c0_0 = arith.constant 0 : index
    %0 = vector.load %arg1[%c0, %c0_0] : memref<2x64xf32, #tpu.memory_space<vmem>>, vector<2x64xf32>
    %c0_1 = arith.constant 0 : index
    %c0_2 = arith.constant 0 : index
    %1 = vector.load %arg9[%c0_1, %c0_2] : memref<2x128xf32, #tpu.memory_space<vmem>>, vector<2x64xf32>
    tpu.vector_store %arg9[%c0_1, %c0_2], %0 {strides = array<i32>} : memref<2x128xf32, #tpu.memory_space<vmem>>, vector<2x64xf32>,
    %c0_3 = arith.constant 0 : index
    %c0_4 = arith.constant 0 : index
    %2 = vector.load %arg2[%c0_3, %c0_4] : memref<2x64xf32, #tpu.memory_space<vmem>>, vector<2x64xf32>
    %c0_5 = arith.constant 0 : index
    %c64 = arith.constant 64 : index
    %3 = vector.load %arg9[%c0_5, %c64] : memref<2x128xf32, #tpu.memory_space<vmem>>, vector<2x64xf32>
    tpu.vector_store %arg9[%c0_5, %c64], %2 {strides = array<i32>} : memref<2x128xf32, #tpu.memory_space<vmem>>, vector<2x64xf32>,
    %c0_6 = arith.constant 0 : index
    %c0_7 = arith.constant 0 : index
    %4 = vector.load %arg9[%c0_6, %c0_7] : memref<2x128xf32, #tpu.memory_space<vmem>>, vector<2x128xf32>
    %5 = arith.truncf %4 : vector<2x128xf32> to vector<2x128xbf16>
    %c0_8 = arith.constant 0 : index
    %c0_9 = arith.constant 0 : index
    %6 = vector.load %arg3[%c0_8, %c0_9] : memref<128x128xbf16, #tpu.memory_space<vmem>>, vector<128x128xbf16>
    %cst = arith.constant dense<0.000000e+00> : vector<2x128xf32>
    %7 = tpu.matmul %5, %6, %cst {dimension_numbers = #tpu.dot_dimension_numbers<[1], [0], [0], [1], [0, 0, 1, 1], [], []>} : vector<2x128xbf16>, vector<128x128xbf16>, vector<2x128xf32> -> vector<2x128xf32>
    %c0_10 = arith.constant 0 : index
    %c0_11 = arith.constant 0 : index
    %c0_12 = arith.constant 0 : index
    %8 = vector.load %arg6[%c0_10, %c0_11, %c0_12] : memref<3x1x256xf32, #tpu.memory_space<vmem>>, vector<1x1x128xf32>
    %9 = vector.shape_cast %8 : vector<1x1x128xf32> to vector<1x128xf32>
    %10 = vector.broadcast %9 : vector<1x128xf32> to vector<2x128xf32>
    %11 = arith.addf %7, %10 : vector<2x128xf32>
    %cst_13 = arith.constant 2.000000e-01 : f32
    %12 = vector.broadcast %cst_13 : f32 to vector<2x128xf32>
    %13 = arith.mulf %12, %11 : vector<2x128xf32>
    %14 = arith.maximumf %11, %13 : vector<2x128xf32>
    %15 = arith.truncf %14 : vector<2x128xf32> to vector<2x128xbf16>
    %c0_14 = arith.constant 0 : index
    %c0_15 = arith.constant 0 : index
    %c0_16 = arith.constant 0 : index
    %16 = vector.load %arg4[%c0_14, %c0_15, %c0_16] : memref<1x128x128xbf16, #tpu.memory_space<vmem>>, vector<1x128x128xbf16>
    %17 = vector.shape_cast %16 : vector<1x128x128xbf16> to vector<128x128xbf16>
    %cst_17 = arith.constant dense<0.000000e+00> : vector<2x128xf32>
    %18 = tpu.matmul %15, %17, %cst_17 {dimension_numbers = #tpu.dot_dimension_numbers<[1], [0], [0], [1], [0, 0, 1, 1], [], []>} : vector<2x128xbf16>, vector<128x128xbf16>, vector<2x128xf32> -> vector<2x128xf32>
    %c1 = arith.constant 1 : index
    %c0_18 = arith.constant 0 : index
    %c0_19 = arith.constant 0 : index
    %19 = vector.load %arg6[%c1, %c0_18, %c0_19] : memref<3x1x256xf32, #tpu.memory_space<vmem>>, vector<1x1x128xf32>
    %20 = vector.shape_cast %19 : vector<1x1x128xf32> to vector<1x128xf32>
    %21 = vector.broadcast %20 : vector<1x128xf32> to vector<2x128xf32>
    %22 = arith.addf %18, %21 : vector<2x128xf32>
    %cst_20 = arith.constant 2.000000e-01 : f32
    %23 = vector.broadcast %cst_20 : f32 to vector<2x128xf32>
    %24 = arith.mulf %23, %22 : vector<2x128xf32>
    %25 = arith.maximumf %22, %24 : vector<2x128xf32>
    %26 = arith.truncf %25 : vector<2x128xf32> to vector<2x128xbf16>
    %c0_21 = arith.constant 0 : index
    %c0_22 = arith.constant 0 : index
    %27 = vector.load %arg5[%c0_21, %c0_22] : memref<128x256xbf16, #tpu.memory_space<vmem>>, vector<128x256xbf16>
    %cst_23 = arith.constant dense<0.000000e+00> : vector<2x256xf32>
    %28 = tpu.matmul %26, %27, %cst_23 {dimension_numbers = #tpu.dot_dimension_numbers<[1], [0], [0], [1], [0, 0, 1, 1], [], []>} : vector<2x128xbf16>, vector<128x256xbf16>, vector<2x256xf32> -> vector<2x256xf32>
    %c2 = arith.constant 2 : index
    %c0_24 = arith.constant 0 : index
    %c0_25 = arith.constant 0 : index
    %29 = vector.load %arg6[%c2, %c0_24, %c0_25] : memref<3x1x256xf32, #tpu.memory_space<vmem>>, vector<1x1x256xf32>
    %30 = vector.shape_cast %29 : vector<1x1x256xf32> to vector<1x256xf32>
    %31 = vector.broadcast %30 : vector<1x256xf32> to vector<2x256xf32>
    %32 = arith.addf %28, %31 : vector<2x256xf32>
    %33 = vector.extract_strided_slice %32 {offsets = [0, 0], sizes = [2, 128], strides = [1, 1]} : vector<2x256xf32> to vector<2x128xf32>
    %c0_26 = arith.constant 0 : index
    %c0_27 = arith.constant 0 : index
    %34 = vector.load %arg7[%c0_26, %c0_27] : memref<2x128xf32, #tpu.memory_space<vmem>>, vector<2x128xf32>
    tpu.vector_store %arg7[%c0_26, %c0_27], %33 {strides = array<i32>} : memref<2x128xf32, #tpu.memory_space<vmem>>, vector<2x128xf32>,
    %35 = vector.extract_strided_slice %32 {offsets = [0, 128], sizes = [2, 128], strides = [1, 1]} : vector<2x256xf32> to vector<2x128xf32>
    %c0_28 = arith.constant 0 : index
    %c0_29 = arith.constant 0 : index
    %36 = vector.load %arg8[%c0_28, %c0_29] : memref<2x128xf32, #tpu.memory_space<vmem>>, vector<2x128xf32>
    tpu.vector_store %arg8[%c0_28, %c0_29], %35 {strides = array<i32>} : memref<2x128xf32, #tpu.memory_space<vmem>>, vector<2x128xf32>,
    return
  }
  func.func @transform_0(%arg0: i32) -> (i32, i32) {
    %c0_i32 = arith.constant 0 : i32
    %c0_i32_0 = arith.constant 0 : i32
    return %arg0, %c0_i32 : i32, i32
  }
  func.func @transform_1(%arg0: i32) -> (i32, i32) {
    %c0_i32 = arith.constant 0 : i32
    %c0_i32_0 = arith.constant 0 : i32
    return %arg0, %c0_i32 : i32, i32
  }
  func.func @transform_2(%arg0: i32) -> (i32, i32) {
    %c0_i32 = arith.constant 0 : i32
    %c0_i32_0 = arith.constant 0 : i32
    %c0_i32_1 = arith.constant 0 : i32
    return %c0_i32, %c0_i32_0 : i32, i32
  }
  func.func @transform_3(%arg0: i32) -> (i32, i32, i32) {
    %c0_i32 = arith.constant 0 : i32
    %c0_i32_0 = arith.constant 0 : i32
    %c0_i32_1 = arith.constant 0 : i32
    %c0_i32_2 = arith.constant 0 : i32
    return %c0_i32, %c0_i32_0, %c0_i32_1 : i32, i32, i32
  }
  func.func @transform_4(%arg0: i32) -> (i32, i32) {
    %c0_i32 = arith.constant 0 : i32
    %c0_i32_0 = arith.constant 0 : i32
    %c0_i32_1 = arith.constant 0 : i32
    return %c0_i32, %c0_i32_0 : i32, i32
  }
  func.func @transform_5(%arg0: i32) -> (i32, i32, i32) {
    %c0_i32 = arith.constant 0 : i32
    %c0_i32_0 = arith.constant 0 : i32
    %c0_i32_1 = arith.constant 0 : i32
    %c0_i32_2 = arith.constant 0 : i32
    return %c0_i32, %c0_i32_0, %c0_i32_1 : i32, i32, i32
  }
  func.func @transform_6(%arg0: i32) -> (i32, i32) {
    %c0_i32 = arith.constant 0 : i32
    %c0_i32_0 = arith.constant 0 : i32
    return %arg0, %c0_i32 : i32, i32
  }
  func.func @transform_7(%arg0: i32) -> (i32, i32) {
    %c0_i32 = arith.constant 0 : i32
    %c0_i32_0 = arith.constant 0 : i32
    return %arg0, %c0_i32 : i32, i32
  }
}

</mosaic_0001>

<llo_original>
// kernel: tpu_custom_call.1
$region0: #{tpu_custom_call.1}
  #allocation0 [shape = 'u32[]', space=smem, size = 0x4, offset = 0x4, fixed_abs, tag = 'smem constant byte address 0x4 - core index']
  #allocation1 [shape = 'u32[144,128]{1,0:T(1,128)}', space=vmem, size = 0x12000, scoped, tag = 'internal scratch']
  #allocation2 [shape = 'f32[2,128]{1,0:T(2,128)}', space=vmem, size = 0x400, scoped, tag = 'scratch operand']
  %s0 = inlined_call_operand.hbm [shape: f32[2,64], index: 0, kind: input, shape index: {}]
  %s1 = inlined_call_operand.hbm [shape: f32[2,64], index: 1, kind: input, shape index: {}]
  %s2 = inlined_call_operand.hbm [shape: bf16[128,128], index: 2, kind: input, shape index: {}]
  %s3 = inlined_call_operand.hbm [shape: bf16[1,128,128], index: 3, kind: input, shape index: {}]
  %s4 = inlined_call_operand.hbm [shape: bf16[128,256], index: 4, kind: input, shape index: {}]
  %s5 = inlined_call_operand.vmem [shape: f32[3,1,256], index: 5, kind: input, shape index: {}]
  %s6 = inlined_call_operand.hbm [shape: f32[2,128], index: 6, kind: output, shape index: {0}]
  %s7 = inlined_call_operand.hbm [shape: f32[2,128], index: 7, kind: output, shape index: {1}]
  %8 = xla_tuple %s6, %s7
  %s9 = sld [smem:[#allocation0]]
  $region62: #{tpu_custom_call.1} parent=0
    _
  %s11 = ssub.s32 1, %s9
  %s12 = scalar_select 0, %s11, %s9
  $region1: #{tpu_custom_call.1} parent=0
    #allocation3 [shape = 'u8[1024]{0}', space=vmem, size = 0x400, scoped, tag = 'input window, operand 0, single buffered']
    #allocation4 [shape = 's32[1]{0}', space=sflag, size = 0x4, scoped, tag = 'scoped memory for tpu_custom_call.1']
    #allocation5 [shape = 's32[1]{0}', space=sflag, size = 0x4, scoped, tag = 'scoped memory for tpu_custom_call.1']
    #allocation6 [shape = 'u8[1024]{0}', space=vmem, size = 0x400, scoped, tag = 'input window, operand 1, single buffered']
    #allocation7 [shape = 's32[1]{0}', space=sflag, size = 0x4, scoped, tag = 'scoped memory for tpu_custom_call.1']
    #allocation8 [shape = 'u8[32768]{0}', space=vmem, size = 0x8000, scoped, tag = 'input window, operand 2, single buffered']
    #allocation9 [shape = 'u8[32768]{0}', space=vmem, size = 0x8000, scoped, tag = 'input window, operand 3, single buffered']
    #allocation10 [shape = 's32[1]{0}', space=sflag, size = 0x4, scoped, tag = 'scoped memory for tpu_custom_call.1']
    #allocation11 [shape = 'u8[65536]{0}', space=vmem, size = 0x10000, scoped, tag = 'input window, operand 4, single buffered']
    #allocation12 [shape = 'u8[1024]{0}', space=vmem, size = 0x400, scoped, tag = 'output window, operand 0, single buffered']
    #allocation13 [shape = 'u8[1024]{0}', space=vmem, size = 0x400, scoped, tag = 'output window, operand 1, single buffered']
    #allocation14 [shape = 's32[1]{0}', space=sflag, size = 0x4, scoped, tag = 'scoped memory for tpu_custom_call.1']
    %13 = vsyncpa [#allocation4], 0
    %14 = vsyncpa [#allocation7], 0
    %15 = vsyncpa [#allocation10], 0
    %16 = vsyncpa [#allocation5], 0
    %17 = vsyncpa [#allocation14], 0
    // Predicated region
    $region2: #{tpu_custom_call.1} parent=1 // pred_check
      _
    $region3: #{tpu_custom_call.1} parent=1 // pred_check_branch
      %19 = sbr.rel (0) target = $region5
    $region4: #{tpu_custom_call.1} parent=1 // pred_region
      %s21 = ssub.s32 32, 32
      %22 = vsyncadd [#allocation4], %s21
      %s24 = sshll.u32 [#allocation3], 4
      %s25 = int_to_ptr.vmem [resolvable:$true] %s24
      %27 = dma.hbm_to_vmem [thread:$0]  %s0, 32, %s25, [#allocation4]
    $region5: #{tpu_custom_call.1} parent=1 // pred_fallthru
      _
    // Predicated region
    $region6: #{tpu_custom_call.1} parent=1 // pred_check
      _
    $region7: #{tpu_custom_call.1} parent=1 // pred_check_branch
      %29 = sbr.rel (0) target = $region9
    $region8: #{tpu_custom_call.1} parent=1 // pred_region
      %s31 = ssub.s32 32, 32
      %32 = vsyncadd [#allocation7], %s31
      %s34 = sshll.u32 [#allocation6], 4
      %s35 = int_to_ptr.vmem [resolvable:$true] %s34
      %37 = dma.hbm_to_vmem [thread:$0]  %s1, 32, %s35, [#allocation7]
    $region9: #{tpu_custom_call.1} parent=1 // pred_fallthru
      _
    // Predicated region
    $region10: #{tpu_custom_call.1} parent=1 // pred_check
      _
    $region11: #{tpu_custom_call.1} parent=1 // pred_check_branch
      %39 = sbr.rel (0) target = $region13
    $region12: #{tpu_custom_call.1} parent=1 // pred_region
      %s41 = ssub.s32 1024, 1024
      %42 = vsyncadd [#allocation7], %s41
      %s43 = sshll.u32 [#allocation8], 4
      %s44 = int_to_ptr.vmem [resolvable:$true] %s43
      %49 = dma.hbm_to_vmem [thread:$0]  %s2, 1024, %s44, [#allocation7], 64, 64, 4
    $region13: #{tpu_custom_call.1} parent=1 // pred_fallthru
      _
    // Predicated region
    $region14: #{tpu_custom_call.1} parent=1 // pred_check
      _
    $region15: #{tpu_custom_call.1} parent=1 // pred_check_branch
      %51 = sbr.rel (0) target = $region17
    $region16: #{tpu_custom_call.1} parent=1 // pred_region
      %s53 = ssub.s32 1024, 1024
      %54 = vsyncadd [#allocation10], %s53
      %s55 = sshll.u32 [#allocation9], 4
      %s56 = int_to_ptr.vmem [resolvable:$true] %s55
      %61 = dma.hbm_to_vmem [thread:$0]  %s3, 1024, %s56, [#allocation10], 64, 64, 4
    $region17: #{tpu_custom_call.1} parent=1 // pred_fallthru
      _
    // Predicated region
    $region18: #{tpu_custom_call.1} parent=1 // pred_check
      _
    $region19: #{tpu_custom_call.1} parent=1 // pred_check_branch
      %63 = sbr.rel (0) target = $region21
    $region20: #{tpu_custom_call.1} parent=1 // pred_region
      %s65 = ssub.s32 2048, 2048
      %66 = vsyncadd [#allocation10], %s65
      %s67 = sshll.u32 [#allocation11], 4
      %s68 = int_to_ptr.vmem [resolvable:$true] %s67
      %73 = dma.hbm_to_vmem [thread:$0]  %s4, 2048, %s68, [#allocation10], 128, 128, 8
    $region21: #{tpu_custom_call.1} parent=1 // pred_fallthru
      _
    // Predicated region
    $region22: #{tpu_custom_call.1} parent=1 // pred_check
      _
    $region23: #{tpu_custom_call.1} parent=1 // pred_check_branch
      %75 = sbr.rel (0) target = $region25
    $region24: #{tpu_custom_call.1} parent=1 // pred_region
      _
    $region25: #{tpu_custom_call.1} parent=1 // pred_fallthru
      _
    // Predicated region
    $region26: #{tpu_custom_call.1} parent=1 // pred_check
      _
    $region27: #{tpu_custom_call.1} parent=1 // pred_check_branch
      %77 = sbr.rel (0) target = $region29
    $region28: #{tpu_custom_call.1} parent=1 // pred_region
      %78 = dma.done [#allocation4], 32
    $region29: #{tpu_custom_call.1} parent=1 // pred_fallthru
      _
    // Predicated region
    $region30: #{tpu_custom_call.1} parent=1 // pred_check
      _
    $region31: #{tpu_custom_call.1} parent=1 // pred_check_branch
      %80 = sbr.rel (0) target = $region33
    $region32: #{tpu_custom_call.1} parent=1 // pred_region
      %81 = dma.done [#allocation7], 32
    $region33: #{tpu_custom_call.1} parent=1 // pred_fallthru
      _
    // Predicated region
    $region34: #{tpu_custom_call.1} parent=1 // pred_check
      _
    $region35: #{tpu_custom_call.1} parent=1 // pred_check_branch
      %83 = sbr.rel (0) target = $region37
    $region36: #{tpu_custom_call.1} parent=1 // pred_region
      %84 = dma.done [#allocation7], 1024
    $region37: #{tpu_custom_call.1} parent=1 // pred_fallthru
      _
    // Predicated region
    $region38: #{tpu_custom_call.1} parent=1 // pred_check
      _
    $region39: #{tpu_custom_call.1} parent=1 // pred_check_branch
      %86 = sbr.rel (0) target = $region41
    $region40: #{tpu_custom_call.1} parent=1 // pred_region
      %87 = dma.done [#allocation10], 1024
    $region41: #{tpu_custom_call.1} parent=1 // pred_fallthru
      _
    // Predicated region
    $region42: #{tpu_custom_call.1} parent=1 // pred_check
      _
    $region43: #{tpu_custom_call.1} parent=1 // pred_check_branch
      %89 = sbr.rel (0) target = $region45
    $region44: #{tpu_custom_call.1} parent=1 // pred_region
      %90 = dma.done [#allocation10], 2048
    $region45: #{tpu_custom_call.1} parent=1 // pred_fallthru
      _
    %v92 = vld [vmem:[#allocation3] sm:$0x3]
    %vm93 = vcmask 517120
    %94 = vst.msk [vmem:[#allocation2] sm:$0x3] %vm93, %v92
    %v95 = vld [vmem:[#allocation6] sm:$0x3]
    %97 = vrot.lane.b32.xlu0 %v95, 64
    %v98 = vpop.permute.xlu0 %97
    %vm100 = vcmask 1041920
    %101 = vst.msk [vmem:[#allocation2] sm:$0x3] %vm100, %v98
    %v102 = vld [vmem:[#allocation2] sm:$0x3]
    %v103 = vpack.c.bf16 %v102, %v102
    %v104 = vld [vmem:[#allocation8] sm:$0xf]
    %v105 = vld [vmem:[#allocation8 + $0x4] sm:$0xf]
    %v106 = vld [vmem:[#allocation8 + $0x8] sm:$0xf]
    %v107 = vld [vmem:[#allocation8 + $0xc] sm:$0xf]
    %v108 = vld [vmem:[#allocation8 + $0x10] sm:$0xf]
    %v109 = vld [vmem:[#allocation8 + $0x14] sm:$0xf]
    %v110 = vld [vmem:[#allocation8 + $0x18] sm:$0xf]
    %v111 = vld [vmem:[#allocation8 + $0x1c] sm:$0xf]
    %v112 = vld [vmem:[#allocation8 + $0x20] sm:$0xf]
    %v113 = vld [vmem:[#allocation8 + $0x24] sm:$0xf]
    %v114 = vld [vmem:[#allocation8 + $0x28] sm:$0xf]
    %v115 = vld [vmem:[#allocation8 + $0x2c] sm:$0xf]
    %v116 = vld [vmem:[#allocation8 + $0x30] sm:$0xf]
    %v117 = vld [vmem:[#allocation8 + $0x34] sm:$0xf]
    %v118 = vld [vmem:[#allocation8 + $0x38] sm:$0xf]
    %v119 = vld [vmem:[#allocation8 + $0x3c] sm:$0xf]
    %v120 = vld [vmem:[%s5] sm:$0x1]
    %v122 = vlaneseq
    %v123 = vshrl.u32 %v122, 7
    %v124 = vsub.s32 0, %v123
    %v125 = vrot.slane %v120, %v124
    %v143 = vunpack.c.l.b16 %v104
    %v144 = vunpack.c.l.b16 %v105
    %v145 = vunpack.c.l.b16 %v106
    %v146 = vunpack.c.l.b16 %v107
    %v147 = vunpack.c.l.b16 %v108
    %v148 = vunpack.c.l.b16 %v109
    %v149 = vunpack.c.l.b16 %v110
    %v150 = vunpack.c.l.b16 %v111
    %v151 = vunpack.c.l.b16 %v112
    %v152 = vunpack.c.l.b16 %v113
    %v153 = vunpack.c.l.b16 %v114
    %v154 = vunpack.c.l.b16 %v115
    %v155 = vunpack.c.l.b16 %v116
    %v156 = vunpack.c.l.b16 %v117
    %v157 = vunpack.c.l.b16 %v118
    %v158 = vunpack.c.l.b16 %v119
    %v159 = vpack.c.b16 %v144, %v143
    %v160 = vpack.c.b16 %v146, %v145
    %v161 = vpack.c.b16 %v148, %v147
    %v162 = vpack.c.b16 %v150, %v149
    %v163 = vpack.c.b16 %v152, %v151
    %v164 = vpack.c.b16 %v154, %v153
    %v165 = vpack.c.b16 %v156, %v155
    %v166 = vpack.c.b16 %v158, %v157
    %175 = vmatprep.subr.bf16.mxu0 0
    %176 = vmatpush1.bf16.msra.mxu0 %v166
    %177 = vmatprep.subr.bf16.mxu0 0
    %178 = vmatpush1.bf16.msra.mxu0 %v165
    %179 = vmatprep.subr.bf16.mxu0 0
    %180 = vmatpush1.bf16.msra.mxu0 %v164
    %181 = vmatprep.subr.bf16.mxu0 0
    %182 = vmatpush1.bf16.msra.mxu0 %v163
    %183 = vmatprep.subr.bf16.mxu0 0
    %184 = vmatpush1.bf16.msra.mxu0 %v162
    %185 = vmatprep.subr.bf16.mxu0 0
    %186 = vmatpush1.bf16.msra.mxu0 %v161
    %187 = vmatprep.subr.bf16.mxu0 0
    %188 = vmatpush1.bf16.msra.mxu0 %v160
    %189 = vmatprep.subr.bf16.mxu0 0
    %190 = vmatpush1.bf16.msra.mxu0 %v159
    %191 = vmatprep.subr.bf16.mxu0 0
    %192 = vmatpush2.bf16.msra.mxu0 0
    %193 = vmatprep.subr.bf16.mxu0 0
    %194 = vmatpush2.bf16.msra.mxu0 0
    %195 = vmatprep.subr.bf16.mxu0 0
    %196 = vmatpush2.bf16.msra.mxu0 0
    %197 = vmatprep.subr.bf16.mxu0 0
    %198 = vmatpush2.bf16.msra.mxu0 0
    %199 = vmatprep.subr.bf16.mxu0 0
    %200 = vmatpush2.bf16.msra.mxu0 0
    %201 = vmatprep.subr.bf16.mxu0 0
    %202 = vmatpush2.bf16.msra.mxu0 0
    %203 = vmatprep.subr.bf16.mxu0 0
    %204 = vmatpush2.bf16.msra.mxu0 0
    %205 = vmatprep.subr.bf16.mxu0 0
    %206 = vmatpush2.bf16.msra.mxu0 0
    %207 = vmatprep.mubr.bf16.mxu0 0
    %208 = vmatmul.mubr.bf16.gmra.mxu0 %v103
    %v209 = vpop.f32.mrf.mxu0
    %v210 = vadd.f32 %v125, %v209
    %v211 = vpop.f32.mrf.mxu0
    %v212 = vpop.f32.mrf.mxu0
    %v213 = vpop.f32.mrf.mxu0
    %214 = vdwg.mxu0
    %v215 = vmul.f32 %v210, 0.2
    %v216 = vmax.f32 %v210, %v215
    %v217 = vpack.c.bf16 %v216, %v216
    %v218 = vld [vmem:[#allocation9] sm:$0xf]
    %v219 = vld [vmem:[#allocation9 + $0x4] sm:$0xf]
    %v220 = vld [vmem:[#allocation9 + $0x8] sm:$0xf]
    %v221 = vld [vmem:[#allocation9 + $0xc] sm:$0xf]
    %v222 = vld [vmem:[#allocation9 + $0x10] sm:$0xf]
    %v223 = vld [vmem:[#allocation9 + $0x14] sm:$0xf]
    %v224 = vld [vmem:[#allocation9 + $0x18] sm:$0xf]
    %v225 = vld [vmem:[#allocation9 + $0x1c] sm:$0xf]
    %v226 = vld [vmem:[#allocation9 + $0x20] sm:$0xf]
    %v227 = vld [vmem:[#allocation9 + $0x24] sm:$0xf]
    %v228 = vld [vmem:[#allocation9 + $0x28] sm:$0xf]
    %v229 = vld [vmem:[#allocation9 + $0x2c] sm:$0xf]
    %v230 = vld [vmem:[#allocation9 + $0x30] sm:$0xf]
    %v231 = vld [vmem:[#allocation9 + $0x34] sm:$0xf]
    %v232 = vld [vmem:[#allocation9 + $0x38] sm:$0xf]
    %v233 = vld [vmem:[#allocation9 + $0x3c] sm:$0xf]
    %s234 = scalar_lea.vmem %s5, 2
    %v235 = vld [vmem:[%s234] sm:$0x1]
    %v237 = vlaneseq
    %v238 = vshrl.u32 %v237, 7
    %v239 = vsub.s32 0, %v238
    %v240 = vrot.slane %v235, %v239
    %v258 = vunpack.c.l.b16 %v218
    %v259 = vunpack.c.l.b16 %v219
    %v260 = vunpack.c.l.b16 %v220
    %v261 = vunpack.c.l.b16 %v221
    %v262 = vunpack.c.l.b16 %v222
    %v263 = vunpack.c.l.b16 %v223
    %v264 = vunpack.c.l.b16 %v224
    %v265 = vunpack.c.l.b16 %v225
    %v266 = vunpack.c.l.b16 %v226
    %v267 = vunpack.c.l.b16 %v227
    %v268 = vunpack.c.l.b16 %v228
    %v269 = vunpack.c.l.b16 %v229
    %v270 = vunpack.c.l.b16 %v230
    %v271 = vunpack.c.l.b16 %v231
    %v272 = vunpack.c.l.b16 %v232
    %v273 = vunpack.c.l.b16 %v233
    %v274 = vpack.c.b16 %v259, %v258
    %v275 = vpack.c.b16 %v261, %v260
    %v276 = vpack.c.b16 %v263, %v262
    %v277 = vpack.c.b16 %v265, %v264
    %v278 = vpack.c.b16 %v267, %v266
    %v279 = vpack.c.b16 %v269, %v268
    %v280 = vpack.c.b16 %v271, %v270
    %v281 = vpack.c.b16 %v273, %v272
    %290 = vmatprep.subr.bf16.mxu0 0
    %291 = vmatpush1.bf16.msra.mxu0 %v281
    %292 = vmatprep.subr.bf16.mxu0 0
    %293 = vmatpush1.bf16.msra.mxu0 %v280
    %294 = vmatprep.subr.bf16.mxu0 0
    %295 = vmatpush1.bf16.msra.mxu0 %v279
    %296 = vmatprep.subr.bf16.mxu0 0
    %297 = vmatpush1.bf16.msra.mxu0 %v278
    %298 = vmatprep.subr.bf16.mxu0 0
    %299 = vmatpush1.bf16.msra.mxu0 %v277
    %300 = vmatprep.subr.bf16.mxu0 0
    %301 = vmatpush1.bf16.msra.mxu0 %v276
    %302 = vmatprep.subr.bf16.mxu0 0
    %303 = vmatpush1.bf16.msra.mxu0 %v275
    %304 = vmatprep.subr.bf16.mxu0 0
    %305 = vmatpush1.bf16.msra.mxu0 %v274
    %306 = vmatprep.subr.bf16.mxu0 0
    %307 = vmatpush2.bf16.msra.mxu0 0
    %308 = vmatprep.subr.bf16.mxu0 0
    %309 = vmatpush2.bf16.msra.mxu0 0
    %310 = vmatprep.subr.bf16.mxu0 0
    %311 = vmatpush2.bf16.msra.mxu0 0
    %312 = vmatprep.subr.bf16.mxu0 0
    %313 = vmatpush2.bf16.msra.mxu0 0
    %314 = vmatprep.subr.bf16.mxu0 0
    %315 = vmatpush2.bf16.msra.mxu0 0
    %316 = vmatprep.subr.bf16.mxu0 0
    %317 = vmatpush2.bf16.msra.mxu0 0
    %318 = vmatprep.subr.bf16.mxu0 0
    %319 = vmatpush2.bf16.msra.mxu0 0
    %320 = vmatprep.subr.bf16.mxu0 0
    %321 = vmatpush2.bf16.msra.mxu0 0
    %322 = vmatprep.mubr.bf16.mxu0 0
    %323 = vmatmul.mubr.bf16.gmra.mxu0 %v217
    %v324 = vpop.f32.mrf.mxu0
    %v325 = vadd.f32 %v240, %v324
    %v326 = vpop.f32.mrf.mxu0
    %v327 = vpop.f32.mrf.mxu0
    %v328 = vpop.f32.mrf.mxu0
    %329 = vdwg.mxu0
    %v330 = vmul.f32 %v325, 0.2
    %v331 = vmax.f32 %v325, %v330
    %v332 = vpack.c.bf16 %v331, %v331
    %v333 = vld [vmem:[#allocation11] sm:$0xff]
    %v334 = vld [vmem:[#allocation11 + $0x8] sm:$0xff]
    %v335 = vld [vmem:[#allocation11 + $0x10] sm:$0xff]
    %v336 = vld [vmem:[#allocation11 + $0x18] sm:$0xff]
    %v337 = vld [vmem:[#allocation11 + $0x20] sm:$0xff]
    %v338 = vld [vmem:[#allocation11 + $0x28] sm:$0xff]
    %v339 = vld [vmem:[#allocation11 + $0x30] sm:$0xff]
    %v340 = vld [vmem:[#allocation11 + $0x38] sm:$0xff]
    %v341 = vld [vmem:[#allocation11 + $0x40] sm:$0xff]
    %v342 = vld [vmem:[#allocation11 + $0x48] sm:$0xff]
    %v343 = vld [vmem:[#allocation11 + $0x50] sm:$0xff]
    %v344 = vld [vmem:[#allocation11 + $0x58] sm:$0xff]
    %v345 = vld [vmem:[#allocation11 + $0x60] sm:$0xff]
    %v346 = vld [vmem:[#allocation11 + $0x68] sm:$0xff]
    %v347 = vld [vmem:[#allocation11 + $0x70] sm:$0xff]
    %v348 = vld [vmem:[#allocation11 + $0x78] sm:$0xff]
    %s349 = scalar_lea.vmem %s5, 4
    %v350 = vld [vmem:[%s349] sm:$0x3]
    %v352 = vlaneseq
    %v353 = vshrl.u32 %v352, 7
    %v354 = vsub.s32 0, %v353
    %v355 = vrot.slane %v350, %v354
    %v356 = vlaneseq
    %v357 = vshrl.u32 %v356, 7
    %v358 = vsub.s32 1, %v357
    %v359 = vrot.slane %v350, %v358
    %v378 = vunpack.c.l.b16 %v333
    %v379 = vunpack.c.h.b16 %v333
    %v380 = vunpack.c.l.b16 %v334
    %v381 = vunpack.c.h.b16 %v334
    %v382 = vunpack.c.l.b16 %v335
    %v383 = vunpack.c.h.b16 %v335
    %v384 = vunpack.c.l.b16 %v336
    %v385 = vunpack.c.h.b16 %v336
    %v386 = vunpack.c.l.b16 %v337
    %v387 = vunpack.c.h.b16 %v337
    %v388 = vunpack.c.l.b16 %v338
    %v389 = vunpack.c.h.b16 %v338
    %v390 = vunpack.c.l.b16 %v339
    %v391 = vunpack.c.h.b16 %v339
    %v392 = vunpack.c.l.b16 %v340
    %v393 = vunpack.c.h.b16 %v340
    %v394 = vunpack.c.l.b16 %v341
    %v395 = vunpack.c.h.b16 %v341
    %v396 = vunpack.c.l.b16 %v342
    %v397 = vunpack.c.h.b16 %v342
    %v398 = vunpack.c.l.b16 %v343
    %v399 = vunpack.c.h.b16 %v343
    %v400 = vunpack.c.l.b16 %v344
    %v401 = vunpack.c.h.b16 %v344
    %v402 = vunpack.c.l.b16 %v345
    %v403 = vunpack.c.h.b16 %v345
    %v404 = vunpack.c.l.b16 %v346
    %v405 = vunpack.c.h.b16 %v346
    %v406 = vunpack.c.l.b16 %v347
    %v407 = vunpack.c.h.b16 %v347
    %v408 = vunpack.c.l.b16 %v348
    %v409 = vunpack.c.h.b16 %v348
    %v410 = vpack.c.b16 %v380, %v378
    %v411 = vpack.c.b16 %v381, %v379
    %v412 = vpack.c.b16 %v384, %v382
    %v413 = vpack.c.b16 %v385, %v383
    %v414 = vpack.c.b16 %v388, %v386
    %v415 = vpack.c.b16 %v389, %v387
    %v416 = vpack.c.b16 %v392, %v390
    %v417 = vpack.c.b16 %v393, %v391
    %v418 = vpack.c.b16 %v396, %v394
    %v419 = vpack.c.b16 %v397, %v395
    %v420 = vpack.c.b16 %v400, %v398
    %v421 = vpack.c.b16 %v401, %v399
    %v422 = vpack.c.b16 %v404, %v402
    %v423 = vpack.c.b16 %v405, %v403
    %v424 = vpack.c.b16 %v408, %v406
    %v425 = vpack.c.b16 %v409, %v407
    %442 = vmatprep.subr.bf16.mxu0 %v425
    %443 = vmatpush1.bf16.msra.mxu0 %v424
    %444 = vmatprep.subr.bf16.mxu0 %v423
    %445 = vmatpush1.bf16.msra.mxu0 %v422
    %446 = vmatprep.subr.bf16.mxu0 %v421
    %447 = vmatpush1.bf16.msra.mxu0 %v420
    %448 = vmatprep.subr.bf16.mxu0 %v419
    %449 = vmatpush1.bf16.msra.mxu0 %v418
    %450 = vmatprep.subr.bf16.mxu0 %v417
    %451 = vmatpush1.bf16.msra.mxu0 %v416
    %452 = vmatprep.subr.bf16.mxu0 %v415
    %453 = vmatpush1.bf16.msra.mxu0 %v414
    %454 = vmatprep.subr.bf16.mxu0 %v413
    %455 = vmatpush1.bf16.msra.mxu0 %v412
    %456 = vmatprep.subr.bf16.mxu0 %v411
    %457 = vmatpush1.bf16.msra.mxu0 %v410
    %458 = vmatprep.subr.bf16.mxu0 0
    %459 = vmatpush2.bf16.msra.mxu0 0
    %460 = vmatprep.subr.bf16.mxu0 0
    %461 = vmatpush2.bf16.msra.mxu0 0
    %462 = vmatprep.subr.bf16.mxu0 0
    %463 = vmatpush2.bf16.msra.mxu0 0
    %464 = vmatprep.subr.bf16.mxu0 0
    %465 = vmatpush2.bf16.msra.mxu0 0
    %466 = vmatprep.subr.bf16.mxu0 0
    %467 = vmatpush2.bf16.msra.mxu0 0
    %468 = vmatprep.subr.bf16.mxu0 0
    %469 = vmatpush2.bf16.msra.mxu0 0
    %470 = vmatprep.subr.bf16.mxu0 0
    %471 = vmatpush2.bf16.msra.mxu0 0
    %472 = vmatprep.subr.bf16.mxu0 0
    %473 = vmatpush2.bf16.msra.mxu0 0
    %474 = vmatprep.mubr.bf16.mxu0 0
    %475 = vmatmul.mubr.bf16.gmra.mxu0 %v332
    %v476 = vpop.f32.mrf.mxu0
    %v477 = vadd.f32 %v355, %v476
    %v478 = vpop.f32.mrf.mxu0
    %v479 = vadd.f32 %v359, %v478
    %v480 = vpop.f32.mrf.mxu0
    %v481 = vpop.f32.mrf.mxu0
    %482 = vdwg.mxu0
    %483 = vst [vmem:[#allocation12] sm:$0x3] %v477
    %484 = vst [vmem:[#allocation13] sm:$0x3] %v479
    // Predicated region
    $region46: #{tpu_custom_call.1} parent=1 // pred_check
      _
    $region47: #{tpu_custom_call.1} parent=1 // pred_check_branch
      %486 = sbr.rel (0) target = $region49
    $region48: #{tpu_custom_call.1} parent=1 // pred_region
      %s488 = ssub.s32 32, 32
      %489 = vsyncadd [#allocation5], %s488
      %s491 = sshll.u32 [#allocation12], 4
      %s492 = int_to_ptr.vmem [resolvable:$true] %s491
      %494 = dma.vmem_to_hbm [thread:$0]  %s492, 32, %s6, [#allocation5]
    $region49: #{tpu_custom_call.1} parent=1 // pred_fallthru
      _
    // Predicated region
    $region50: #{tpu_custom_call.1} parent=1 // pred_check
      _
    $region51: #{tpu_custom_call.1} parent=1 // pred_check_branch
      %496 = sbr.rel (0) target = $region53
    $region52: #{tpu_custom_call.1} parent=1 // pred_region
      %s498 = ssub.s32 32, 32
      %499 = vsyncadd [#allocation14], %s498
      %s501 = sshll.u32 [#allocation13], 4
      %s502 = int_to_ptr.vmem [resolvable:$true] %s501
      %504 = dma.vmem_to_hbm [thread:$0]  %s502, 32, %s7, [#allocation14]
    $region53: #{tpu_custom_call.1} parent=1 // pred_fallthru
      _
    // Predicated region
    $region54: #{tpu_custom_call.1} parent=1 // pred_check
      _
    $region55: #{tpu_custom_call.1} parent=1 // pred_check_branch
      %506 = sbr.rel (0) target = $region57
    $region56: #{tpu_custom_call.1} parent=1 // pred_region
      %507 = dma.done [#allocation5], 32
    $region57: #{tpu_custom_call.1} parent=1 // pred_fallthru
      _
    // Predicated region
    $region58: #{tpu_custom_call.1} parent=1 // pred_check
      _
    $region59: #{tpu_custom_call.1} parent=1 // pred_check_branch
      %509 = sbr.rel (0) target = $region61
    $region60: #{tpu_custom_call.1} parent=1 // pred_region
      %510 = dma.done [#allocation14], 32
    $region61: #{tpu_custom_call.1} parent=1 // pred_fallthru
      _
    %511 = vsyncpa [#allocation4], 1
    %512 = vsyncpa [#allocation7], 1
    %513 = vsyncpa [#allocation10], 1
    %514 = vsyncpa [#allocation5], 1
    %515 = vsyncpa [#allocation14], 1

</llo_original>
